<compile_context>
chip_gen: v7x
topology: tpu7x:2x2x1
jax: 0.10.0
libtpu: 0.0.40
codegen_flags: <defaults>
</compile_context>

<pallas_src>
import functools
import math

import jax
import jax.numpy as jnp
from jax import lax
from jax.experimental import pallas as pl
from jax.experimental.pallas import tpu as pltpu


# ---------------------------------------------------------------------------
# Generation-aware sizing helpers
# ---------------------------------------------------------------------------
@functools.lru_cache(maxsize=None)
def _physical_vmem_bytes():
    try:
        cap = int(pltpu.get_tpu_info().vmem_capacity_bytes)
        if cap > 0:
            return cap
    except Exception:
        pass
    return 64 * 1024 * 1024  # conservative default (v7x-sized)


def _vmem_budget_bytes():
    # Leave ~1/4 of physical VMEM as headroom for the compiler.
    return (_physical_vmem_bytes() * 3) // 4


def _max_block_elems(itemsize):
    """Max padded element count of one x block, derived from the VMEM budget."""
    budget = _vmem_budget_bytes()
    # in + out blocks, double buffered (4 * itemsize each element), plus
    # roughly 3 f32 temporaries the kernel body materializes.
    per_elem = 4 * itemsize + 12
    elems = budget // per_elem
    # Diminishing returns past ~8 MiB of raw x per block (per-step overhead
    # ~0.35 us is already small there even at v7x HBM bandwidth).
    elems = min(elems, (8 * 1024 * 1024) // itemsize)
    return int(max(elems, 8 * 128))


def _round_up(x, m):
    return -(-x // m) * m


def _pick_tile(extent, align, max_tile, want_blocks=1):
    """Pick a legal TPU block size along one axis.

    Returns either the full (small) extent or a multiple of `align`.  Grids
    are built with pl.cdiv, so the extent need not divide evenly — the
    trailing block is partial/masked.  Never falls back to an oversized
    full-extent block for unaligned dims.
    """
    extent = int(extent)
    max_tile = max(int(max_tile), align)
    if extent <= align:
        return extent  # one small full-extent block (always legal)
    tile = min(max_tile, extent)
    tile = (tile // align) * align  # >= align by construction
    # Prefer >= want_blocks grid steps (pipelining + v7x dual TensorCore)
    # when the extent is big enough to split into aligned tiles.
    if want_blocks > 1 and pl.cdiv(extent, tile) < want_blocks:
        split = -(-extent // want_blocks)          # ceil(extent / want_blocks)
        split = _round_up(split, align)
        if split < tile:
            tile = split
    return tile


def _compiler_params(n_parallel_axes):
    return pltpu.CompilerParams(
        dimension_semantics=("parallel",) * n_parallel_axes,
        vmem_limit_bytes=int(_vmem_budget_bytes()),
    )


def _cost_estimate(n_elems, n_groups, itemsize):
    # ~8 flops/element (square, sums, center, scale, shift), one rsqrt per
    # normalization group, one read + one write of x.
    return pl.CostEstimate(
        flops=int(8 * n_elems),
        transcendentals=int(n_groups),
        bytes_accessed=int(2 * n_elems * itemsize + 8 * n_groups),
    )


# ---------------------------------------------------------------------------
# Kernels
# ---------------------------------------------------------------------------
def _ln_rows_kernel(x_ref, w_ref, b_ref, o_ref, *, eps, inv_c):
    """channels_last, generic C. x_ref: (tm, C); w/b: (1, C). Rows normalized."""
    x = x_ref[...].astype(jnp.float32)
    mean = jnp.sum(x, axis=-1, keepdims=True) * inv_c
    ex2 = jnp.sum(x * x, axis=-1, keepdims=True) * inv_c
    inv = lax.rsqrt(ex2 - mean * mean + eps)
    w = w_ref[...].astype(jnp.float32)
    b = b_ref[...].astype(jnp.float32)
    o_ref[...] = ((x - mean) * inv * w + b).astype(o_ref.dtype)


def _ln_cols_kernel(x_ref, w_ref, b_ref, o_ref, *, eps, inv_c):
    """channels_first. x_ref: (C, thw); w/b: (C, 1). Columns normalized."""
    x = x_ref[...].astype(jnp.float32)
    mean = jnp.sum(x, axis=0, keepdims=True) * inv_c
    ex2 = jnp.sum(x * x, axis=0, keepdims=True) * inv_c
    inv = lax.rsqrt(ex2 - mean * mean + eps)
    w = w_ref[...].astype(jnp.float32)
    b = b_ref[...].astype(jnp.float32)
    o_ref[...] = ((x - mean) * inv * w + b).astype(o_ref.dtype)


def _segment_allsum(x, seg):
    """Each lane gets the sum over its contiguous `seg`-lane segment.

    `seg` is a power of two dividing the lane count.  Hypercube butterfly:
    log2(seg) shift + select + add steps, exact f32 arithmetic (no MXU /
    low-precision path involved).
    """
    lanes = x.shape[-1]
    lane = lax.broadcasted_iota(jnp.int32, x.shape, x.ndim - 1)
    s = x
    d = 1
    while d < seg:
        fwd = jnp.concatenate([s[:, d:], s[:, :d]], axis=-1)                  # s[lane + d]
        bwd = jnp.concatenate([s[:, lanes - d:], s[:, :lanes - d]], axis=-1)  # s[lane - d]
        s = s + jnp.where((lane & d) == 0, fwd, bwd)
        d *= 2
    return s


def _ln_packed_kernel(x_ref, w_ref, b_ref, o_ref, *, eps, c):
    """channels_last with small power-of-two C, packed g = 128//C rows per
    vector row so the last dim is lane-dense. x_ref: (tm, 128); w/b: (1, 128)
    holding weight/bias tiled g times."""
    x = x_ref[...].astype(jnp.float32)
    inv_c = 1.0 / c
    mean = _segment_allsum(x, c) * inv_c
    ex2 = _segment_allsum(x * x, c) * inv_c
    inv = lax.rsqrt(ex2 - mean * mean + eps)
    w = w_ref[...].astype(jnp.float32)
    b = b_ref[...].astype(jnp.float32)
    o_ref[...] = ((x - mean) * inv * w + b).astype(o_ref.dtype)


# ---------------------------------------------------------------------------
# Wrappers
# ---------------------------------------------------------------------------
def _layer_norm_channels_last(x, weight, bias, eps):
    """x: (..., C), normalize over the last axis."""
    orig_shape = x.shape
    c = int(orig_shape[-1])
    m = int(math.prod(orig_shape[:-1])) if len(orig_shape) > 1 else 1
    itemsize = jnp.dtype(x.dtype).itemsize
    max_elems = _max_block_elems(itemsize)

    x2 = x.reshape(m, c)
    w32 = weight.reshape(-1).astype(jnp.float32)
    b32 = bias.reshape(-1).astype(jnp.float32)

    lane_pack = 128
    g = lane_pack // c if (0 < c < lane_pack and lane_pack % c == 0) else 1

    if g > 1 and m % g == 0:
        # --- lane-dense packed path (small power-of-two C) -----------------
        mp = m // g
        p = g * c  # == 128
        xp = x2.reshape(mp, p)                  # contiguous row-major view
        wp = jnp.tile(w32, g).reshape(1, p)
        bp = jnp.tile(b32, g).reshape(1, p)

        tm = _pick_tile(mp, 8, max(8, max_elems // p), want_blocks=2)
        grid = (pl.cdiv(mp, tm),)
        out = pl.pallas_call(
            functools.partial(_ln_packed_kernel, eps=float(eps), c=c),
            out_shape=jax.ShapeDtypeStruct((mp, p), x.dtype),
            grid=grid,
            in_specs=[
                pl.BlockSpec((tm, p), lambda i: (i, 0)),
                pl.BlockSpec((1, p), lambda i: (0, 0)),
                pl.BlockSpec((1, p), lambda i: (0, 0)),
            ],
            out_specs=pl.BlockSpec((tm, p), lambda i: (i, 0)),
            compiler_params=_compiler_params(1),
            cost_estimate=_cost_estimate(m * c, m, itemsize),
        )(xp, wp, bp)
        return out.reshape(orig_shape)

    # --- general path (C already lane-dense, or not packable) --------------
    c_pad = _round_up(max(c, 1), 128)
    tm = _pick_tile(m, 8, max(8, max_elems // c_pad), want_blocks=2)
    grid = (pl.cdiv(m, tm),)
    out = pl.pallas_call(
        functools.partial(_ln_rows_kernel, eps=float(eps), inv_c=1.0 / c),
        out_shape=jax.ShapeDtypeStruct((m, c), x.dtype),
        grid=grid,
        in_specs=[
            pl.BlockSpec((tm, c), lambda i: (i, 0)),
            pl.BlockSpec((1, c), lambda i: (0, 0)),
            pl.BlockSpec((1, c), lambda i: (0, 0)),
        ],
        out_specs=pl.BlockSpec((tm, c), lambda i: (i, 0)),
        compiler_params=_compiler_params(1),
        cost_estimate=_cost_estimate(m * c, m, itemsize),
    )(x2, w32.reshape(1, c), b32.reshape(1, c))
    return out.reshape(orig_shape)


def _layer_norm_channels_first(x, weight, bias, eps):
    """x: (N, C, H, W), normalize over the channel axis (dim 1), NCHW layout."""
    n, c, h, w = (int(d) for d in x.shape)
    hw = h * w
    itemsize = jnp.dtype(x.dtype).itemsize
    max_elems = _max_block_elems(itemsize)

    x3 = x.reshape(n, c, hw)
    w2 = weight.reshape(c, 1).astype(jnp.float32)
    b2 = bias.reshape(c, 1).astype(jnp.float32)

    c_pad = _round_up(c, 8)
    want = 2 if n == 1 else 1   # ensure >= 2 total grid steps for v7x's 2 TCs
    thw = _pick_tile(hw, 128, max(128, max_elems // c_pad), want_blocks=want)
    grid = (n, pl.cdiv(hw, thw))

    out = pl.pallas_call(
        functools.partial(_ln_cols_kernel, eps=float(eps), inv_c=1.0 / c),
        out_shape=jax.ShapeDtypeStruct((n, c, hw), x.dtype),
        grid=grid,
        in_specs=[
            pl.BlockSpec((None, c, thw), lambda i, j: (i, 0, j)),  # batch squeezed
            pl.BlockSpec((c, 1), lambda i, j: (0, 0)),
            pl.BlockSpec((c, 1), lambda i, j: (0, 0)),
        ],
        out_specs=pl.BlockSpec((None, c, thw), lambda i, j: (i, 0, j)),
        compiler_params=_compiler_params(2),
        cost_estimate=_cost_estimate(n * c * hw, n * hw, itemsize),
    )(x3, w2, b2)
    return out.reshape(n, c, h, w)


def layer_norm_2d(x, weight, bias, *, eps=1e-6, data_format="channels_first"):
    if data_format == "channels_last":
        return _layer_norm_channels_last(x, weight, bias, eps)
    elif data_format == "channels_first":
        return _layer_norm_channels_first(x, weight, bias, eps)
    else:
        raise NotImplementedError(data_format)


class LayerNorm2d:
    """JAX/Pallas port of the PyTorch LayerNorm2d module (forward only)."""

    def __init__(self, normalized_shape, eps=1e-6, data_format="channels_first"):
        if data_format not in ("channels_last", "channels_first"):
            raise NotImplementedError(data_format)
        self.weight = jnp.ones((normalized_shape,), jnp.float32)
        self.bias = jnp.zeros((normalized_shape,), jnp.float32)
        self.eps = eps
        self.data_format = data_format
        self.normalized_shape = (normalized_shape,)

    def __call__(self, x):
        return layer_norm_2d(
            x, self.weight, self.bias, eps=self.eps, data_format=self.data_format
        )


# ---------------------------------------------------------------------------
# Pure-JAX reference for correctness checks
# ---------------------------------------------------------------------------
def _ref_layer_norm_2d(x, w, b, eps, data_format):
    if data_format == "channels_first":
        mean = jnp.mean(x, axis=1, keepdims=True)
        var = jnp.mean((x - mean) ** 2, axis=1, keepdims=True)
        xn = (x - mean) / jnp.sqrt(var + eps)
        return xn * w[None, :, None, None] + b[None, :, None, None]
    else:
        mean = jnp.mean(x, axis=-1, keepdims=True)
        var = jnp.mean((x - mean) ** 2, axis=-1, keepdims=True)
        xn = (x - mean) / jnp.sqrt(var + eps)
        return xn * w + b


if __name__ == "__main__":
    key = jax.random.PRNGKey(0)
    k0, k1, k2 = jax.random.split(key, 3)

    # --- main test shapes from the module spec: (N, C, H, W) = (2, 4, 16, 16)
    n, c, h, w = 2, 4, 16, 16
    x_cf = jax.random.normal(k0, (n, c, h, w), dtype=jnp.float32)
    weight = jnp.linspace(0.5, 1.5, c, dtype=jnp.float32)
    bias = jnp.linspace(-0.2, 0.2, c, dtype=jnp.float32)

    # channels_first (module default): (N, C, H, W)
    ln_cf = LayerNorm2d(c, eps=1e-6, data_format="channels_first")
    ln_cf.weight, ln_cf.bias = weight, bias
    y_cf = jax.block_until_ready(ln_cf(x_cf))
    y_cf_ref = _ref_layer_norm_2d(x_cf, weight, bias, 1e-6, "channels_first")
    assert y_cf.shape == x_cf.shape and y_cf.dtype == x_cf.dtype
    assert jnp.allclose(y_cf, y_cf_ref, atol=1e-5, rtol=1e-5)

    # channels_last: (N, H, W, C) — exercises the lane-dense packed path (C=4)
    x_cl = jnp.transpose(x_cf, (0, 2, 3, 1))
    ln_cl = LayerNorm2d(c, eps=1e-6, data_format="channels_last")
    ln_cl.weight, ln_cl.bias = weight, bias
    y_cl = jax.block_until_ready(ln_cl(x_cl))
    y_cl_ref = _ref_layer_norm_2d(x_cl, weight, bias, 1e-6, "channels_last")
    assert y_cl.shape == x_cl.shape and y_cl.dtype == x_cl.dtype
    assert jnp.allclose(y_cl, y_cl_ref, atol=1e-5, rtol=1e-5)

    # Cross-check: both formats agree with each other.
    assert jnp.allclose(jnp.transpose(y_cl, (0, 3, 1, 2)), y_cf, atol=1e-5, rtol=1e-5)

    # --- robustness: unaligned spatial size (H*W = 196, partial tail block)
    x_odd = jax.random.normal(k1, (1, 4, 14, 14), dtype=jnp.float32)
    y_odd = jax.block_until_ready(layer_norm_2d(x_odd, weight, bias, eps=1e-6,
                                                data_format="channels_first"))
    y_odd_ref = _ref_layer_norm_2d(x_odd, weight, bias, 1e-6, "channels_first")
    assert jnp.allclose(y_odd, y_odd_ref, atol=1e-5, rtol=1e-5)

    # --- robustness: channels_last general (unpacked) path, C=5, unaligned rows
    c5 = 5
    x_c5 = jax.random.normal(k2, (2, 7, 3, c5), dtype=jnp.float32)
    w5 = jnp.linspace(0.8, 1.2, c5, dtype=jnp.float32)
    b5 = jnp.linspace(-0.1, 0.1, c5, dtype=jnp.float32)
    y_c5 = jax.block_until_ready(layer_norm_2d(x_c5, w5, b5, eps=1e-6,
                                               data_format="channels_last"))
    y_c5_ref = _ref_layer_norm_2d(x_c5, w5, b5, 1e-6, "channels_last")
    assert jnp.allclose(y_c5, y_c5_ref, atol=1e-5, rtol=1e-5)

    print("KERNEL_OK")
</pallas_src>

<mosaic_0001>
module attributes {stable_mosaic.version = 11 : i64} {
  func.func @_ln_cols_kernel(%arg0: i32, %arg1: i32, %arg2: memref<1x4x256xf32, #tpu.memory_space<vmem>>, %arg3: memref<4x1xf32, #tpu.memory_space<vmem>>, %arg4: memref<4x1xf32, #tpu.memory_space<vmem>>, %arg5: memref<1x4x256xf32, #tpu.memory_space<vmem>>) attributes {dimension_semantics = [#tpu.dimension_semantics<parallel>, #tpu.dimension_semantics<parallel>], iteration_bounds = array<i64: 2, 1>, scalar_prefetch = 0 : i64, scratch_operands = 0 : i64, tpu.core_type = #tpu.core_type<tc>, window_params = [{transform_indices = @transform_0, window_bounds = array<i64: 1, 4, 256>}, {pipeline_mode = #tpu.pipeline_mode<synchronous>, transform_indices = @transform_1, window_bounds = array<i64: 4, 1>}, {pipeline_mode = #tpu.pipeline_mode<synchronous>, transform_indices = @transform_2, window_bounds = array<i64: 4, 1>}, {transform_indices = @transform_3, window_bounds = array<i64: 1, 4, 256>}]} {
    %c0 = arith.constant 0 : index
    %c0_0 = arith.constant 0 : index
    %c0_1 = arith.constant 0 : index
    %0 = vector.load %arg2[%c0, %c0_0, %c0_1] : memref<1x4x256xf32, #tpu.memory_space<vmem>>, vector<1x4x256xf32>
    %1 = vector.shape_cast %0 : vector<1x4x256xf32> to vector<4x256xf32>
    %cst = arith.constant dense<0.000000e+00> : vector<256xf32>
    %2 = vector.multi_reduction <add>, %1, %cst [0] : vector<4x256xf32> to vector<256xf32>
    %3 = vector.shape_cast %2 : vector<256xf32> to vector<1x256xf32>
    %cst_2 = arith.constant 2.500000e-01 : f32
    %4 = vector.broadcast %cst_2 : f32 to vector<1x256xf32>
    %5 = arith.mulf %3, %4 : vector<1x256xf32>
    %6 = arith.mulf %1, %1 : vector<4x256xf32>
    %cst_3 = arith.constant dense<0.000000e+00> : vector<256xf32>
    %7 = vector.multi_reduction <add>, %6, %cst_3 [0] : vector<4x256xf32> to vector<256xf32>
    %8 = vector.shape_cast %7 : vector<256xf32> to vector<1x256xf32>
    %cst_4 = arith.constant 2.500000e-01 : f32
    %9 = vector.broadcast %cst_4 : f32 to vector<1x256xf32>
    %10 = arith.mulf %8, %9 : vector<1x256xf32>
    %11 = arith.mulf %5, %5 : vector<1x256xf32>
    %12 = arith.subf %10, %11 : vector<1x256xf32>
    %cst_5 = arith.constant 9.99999997E-7 : f32
    %13 = vector.broadcast %cst_5 : f32 to vector<1x256xf32>
    %14 = arith.addf %12, %13 : vector<1x256xf32>
    %15 = math.rsqrt %14 : vector<1x256xf32>
    %c0_6 = arith.constant 0 : index
    %c0_7 = arith.constant 0 : index
    %16 = vector.load %arg3[%c0_6, %c0_7] : memref<4x1xf32, #tpu.memory_space<vmem>>, vector<4x1xf32>
    %c0_8 = arith.constant 0 : index
    %c0_9 = arith.constant 0 : index
    %17 = vector.load %arg4[%c0_8, %c0_9] : memref<4x1xf32, #tpu.memory_space<vmem>>, vector<4x1xf32>
    %18 = vector.broadcast %5 : vector<1x256xf32> to vector<4x256xf32>
    %19 = arith.subf %1, %18 : vector<4x256xf32>
    %20 = vector.broadcast %15 : vector<1x256xf32> to vector<4x256xf32>
    %21 = arith.mulf %19, %20 : vector<4x256xf32>
    %22 = vector.broadcast %16 : vector<4x1xf32> to vector<4x256xf32>
    %23 = arith.mulf %21, %22 : vector<4x256xf32>
    %24 = vector.broadcast %17 : vector<4x1xf32> to vector<4x256xf32>
    %25 = arith.addf %23, %24 : vector<4x256xf32>
    %c0_10 = arith.constant 0 : index
    %c0_11 = arith.constant 0 : index
    %c0_12 = arith.constant 0 : index
    %26 = vector.load %arg5[%c0_10, %c0_11, %c0_12] : memref<1x4x256xf32, #tpu.memory_space<vmem>>, vector<1x4x256xf32>
    %27 = vector.shape_cast %26 : vector<1x4x256xf32> to vector<4x256xf32>
    %28 = vector.shape_cast %25 : vector<4x256xf32> to vector<1x4x256xf32>
    tpu.vector_store %arg5[%c0_10, %c0_11, %c0_12], %28 {strides = array<i32>} : memref<1x4x256xf32, #tpu.memory_space<vmem>>, vector<1x4x256xf32>,
    return
  }
  func.func @transform_0(%arg0: i32, %arg1: i32) -> (i32, i32, i32) {
    %c0_i32 = arith.constant 0 : i32
    %c0_i32_0 = arith.constant 0 : i32
    return %arg0, %c0_i32, %arg1 : i32, i32, i32
  }
  func.func @transform_1(%arg0: i32, %arg1: i32) -> (i32, i32) {
    %c0_i32 = arith.constant 0 : i32
    %c0_i32_0 = arith.constant 0 : i32
    %c0_i32_1 = arith.constant 0 : i32
    return %c0_i32, %c0_i32_0 : i32, i32
  }
  func.func @transform_2(%arg0: i32, %arg1: i32) -> (i32, i32) {
    %c0_i32 = arith.constant 0 : i32
    %c0_i32_0 = arith.constant 0 : i32
    %c0_i32_1 = arith.constant 0 : i32
    return %c0_i32, %c0_i32_0 : i32, i32
  }
  func.func @transform_3(%arg0: i32, %arg1: i32) -> (i32, i32, i32) {
    %c0_i32 = arith.constant 0 : i32
    %c0_i32_0 = arith.constant 0 : i32
    return %arg0, %c0_i32, %arg1 : i32, i32, i32
  }
}

</mosaic_0001>

<llo_original>
// kernel: tpu_custom_call.1
$region0: #{tpu_custom_call.1}
  #allocation0 [shape = 'u32[]', space=smem, size = 0x4, offset = 0x4, fixed_abs, tag = 'smem constant byte address 0x4 - core index']
  #allocation1 [shape = 'u32[144,128]{1,0:T(1,128)}', space=vmem, size = 0x12000, scoped, tag = 'internal scratch']
  %s0 = inlined_call_operand.hbm [shape: f32[2,4,256], index: 0, kind: input, shape index: {}]
  %s1 = inlined_call_operand.vmem [shape: f32[4,1], index: 1, kind: input, shape index: {}]
  %s2 = inlined_call_operand.vmem [shape: f32[4,1], index: 2, kind: input, shape index: {}]
  %s3 = inlined_call_operand.hbm [shape: f32[2,4,256], index: 3, kind: output, shape index: {}]
  %s4 = sld [smem:[#allocation0]]
  $region49: #{tpu_custom_call.1} parent=0
    _
  %s6 = ssub.s32 1, %s4
  %s7 = scalar_select 0, %s6, %s4
  $region1: #{tpu_custom_call.1} parent=0
    #allocation2 [shape = 'u8[8192]{0}', space=vmem, size = 0x2000, scoped, tag = 'input window, operand 0']
    #allocation3 [shape = 's32[2]{0}', space=sflag, size = 0x8, scoped, tag = 'scoped memory for tpu_custom_call.1']
    #allocation4 [shape = 's32[2]{0}', space=sflag, size = 0x8, scoped, tag = 'scoped memory for tpu_custom_call.1']
    #allocation5 [shape = 'u8[8192]{0}', space=vmem, size = 0x2000, scoped, tag = 'output window, operand 0']
    %8 = vsyncpa [#allocation3], 0
    %s9 = scalar_lea.sflag [#allocation3], 1
    %10 = vsyncpa %s9, 0
    %11 = vsyncpa [#allocation4], 0
    %s12 = scalar_lea.sflag [#allocation4], 1
    %13 = vsyncpa %s12, 0
    loop: start=0, step=1, limit=4
    $region2: #{tpu_custom_call.1} parent=1 // loop_pre_header
      _
    $region3: #{tpu_custom_call.1} parent=1 // loop_header
      %s15 = sphi 0, %s19
      %p16 = scmp.ge.s32.totalorder %s15, 4
      %s22 = sphi 0, %s34
      %s23 = sphi 0, %s30
      %s24 = sphi 0, %s22
      %s25 = sphi 0, %s23
      %s26 = sphi 0, %s24
      %s27 = sphi 0, %s25
      %s39 = sphi 0, %s41
      %s42 = sphi 0, %s39
      %s43 = sphi 0, %s42
      %s59 = sphi 0, %s43
      %s63 = sphi 0, %s63
      %s65 = sphi 0, %s63
      %s66 = sphi 0, %s65
      %s80 = sphi 0, %s66
      %s84 = sphi 0, %s84
      %s86 = sphi 0, %s84
      %s87 = sphi 0, %s86
      %s101 = sphi 0, %s87
      %s109 = sphi 0, %s111
      %s112 = sphi 0, %s109
      %s113 = sphi 0, %s112
      %s129 = sphi 0, %s113
    $region4: #{tpu_custom_call.1} parent=1 // loop_header_branch
      %18 = sbr.rel (%p16) target = $region8
    $region5: #{tpu_custom_call.1} parent=1 // loop_body
      %s20 = ssub.s32 %s15, 1
      %s21 = ssub.s32 %s15, 2
      %s28 = sadd.s32 1, %s23
      %p29 = scmp.ge.s32.totalorder %s28, 1
      %s30 = scalar_select %p29, 0, %s28
      %s31 = sadd.s32 1, %s22
      %s32 = scalar_select %p29, %s31, %s22
      %p33 = scmp.ge.s32.totalorder %s32, 2
      %s34 = scalar_select %p33, 0, %s32
      %s35 = ssub.s32 %s22, %s34
      %s36 = ssub.s32 %s23, %s30
      %s37 = sor.u32 %s35, %s36
      %p38 = scmp.eq.s32.totalorder %s37, 0
      %s40 = sadd.s32 %s39, 1
      %s41 = scalar_select %p38, %s39, %s40
      %p44 = pneg %p38
      %p45 = scmp.eq.s32.totalorder %s15, 1
      %p46 = por %p44, %p45
      %p47 = scmp.ne.s32.totalorder %s39, %s42
      %p48 = scmp.eq.s32.totalorder %s15, 0
      %p49 = por %p47, %p48
      %p50 = scmp.ne.s32.totalorder %s39, %s42
      %p51 = scmp.eq.s32.totalorder %s20, 1
      %p52 = por %p50, %p51
      %p53 = scmp.ne.s32.totalorder %s42, %s43
      %p54 = scmp.eq.s32.totalorder %s20, 0
      %p55 = por %p53, %p54
      %p56 = scmp.ne.s32.totalorder %s42, %s43
      %p57 = scmp.eq.s32.totalorder %s21, 1
      %p58 = por %p56, %p57
      %p60 = scmp.ne.s32.totalorder %s43, %s59
      %p61 = scmp.eq.s32.totalorder %s21, 0
      %p62 = por %p60, %p61
      %s64 = sadd.s32 %s63, 1
      %p67 = scmp.eq.s32.totalorder %s15, 1
      %p68 = scmp.ne.s32.totalorder %s63, %s65
      %p69 = scmp.eq.s32.totalorder %s15, 0
      %p70 = por %p68, %p69
      %p71 = scmp.ne.s32.totalorder %s63, %s65
      %p72 = scmp.eq.s32.totalorder %s20, 1
      %p73 = por %p71, %p72
      %p74 = scmp.ne.s32.totalorder %s65, %s66
      %p75 = scmp.eq.s32.totalorder %s20, 0
      %p76 = por %p74, %p75
      %p77 = scmp.ne.s32.totalorder %s65, %s66
      %p78 = scmp.eq.s32.totalorder %s21, 1
      %p79 = por %p77, %p78
      %p81 = scmp.ne.s32.totalorder %s66, %s80
      %p82 = scmp.eq.s32.totalorder %s21, 0
      %p83 = por %p81, %p82
      %s85 = sadd.s32 %s84, 1
      %p88 = scmp.eq.s32.totalorder %s15, 1
      %p89 = scmp.ne.s32.totalorder %s84, %s86
      %p90 = scmp.eq.s32.totalorder %s15, 0
      %p91 = por %p89, %p90
      %p92 = scmp.ne.s32.totalorder %s84, %s86
      %p93 = scmp.eq.s32.totalorder %s20, 1
      %p94 = por %p92, %p93
      %p95 = scmp.ne.s32.totalorder %s86, %s87
      %p96 = scmp.eq.s32.totalorder %s20, 0
      %p97 = por %p95, %p96
      %p98 = scmp.ne.s32.totalorder %s86, %s87
      %p99 = scmp.eq.s32.totalorder %s21, 1
      %p100 = por %p98, %p99
      %p102 = scmp.ne.s32.totalorder %s87, %s101
      %p103 = scmp.eq.s32.totalorder %s21, 0
      %p104 = por %p102, %p103
      %s105 = ssub.s32 %s22, %s34
      %s106 = ssub.s32 %s23, %s30
      %s107 = sor.u32 %s105, %s106
      %p108 = scmp.eq.s32.totalorder %s107, 0
      %s110 = sadd.s32 %s109, 1
      %s111 = scalar_select %p108, %s109, %s110
      %p114 = pneg %p108
      %p115 = scmp.eq.s32.totalorder %s15, 1
      %p116 = por %p114, %p115
      %p117 = scmp.ne.s32.totalorder %s109, %s112
      %p118 = scmp.eq.s32.totalorder %s15, 0
      %p119 = por %p117, %p118
      %p120 = scmp.ne.s32.totalorder %s109, %s112
      %p121 = scmp.eq.s32.totalorder %s20, 1
      %p122 = por %p120, %p121
      %p123 = scmp.ne.s32.totalorder %s112, %s113
      %p124 = scmp.eq.s32.totalorder %s20, 0
      %p125 = por %p123, %p124
      %p126 = scmp.ne.s32.totalorder %s112, %s113
      %p127 = scmp.eq.s32.totalorder %s21, 1
      %p128 = por %p126, %p127
      %p130 = scmp.ne.s32.totalorder %s113, %s129
      %p131 = scmp.eq.s32.totalorder %s21, 0
      %p132 = por %p130, %p131
      %p133 = scmp.le.s32.totalorder 1, %s15
      %p134 = scmp.lt.s32.totalorder %s15, 3
      %p135 = pnand %p133, %p134
      %p136 = pneg %p135
      // Predicated region
      $region9: #{tpu_custom_call.1} parent=5 // pred_check
        _
      $region10: #{tpu_custom_call.1} parent=5 // pred_check_branch
        %138 = sbr.rel (%p135) target = $region12
      $region11: #{tpu_custom_call.1} parent=5 // pred_region
        %s139 = ssub.s32 %s15, 1
        // Predicated region
        $region13: #{tpu_custom_call.1} parent=11 // pred_check
          %p140 = pneg %p76
        $region14: #{tpu_custom_call.1} parent=11 // pred_check_branch
          %142 = sbr.rel (%p140) target = $region16
        $region15: #{tpu_custom_call.1} parent=11 // pred_region
          _
        $region16: #{tpu_custom_call.1} parent=11 // pred_fallthru
          _
        // Predicated region
        $region17: #{tpu_custom_call.1} parent=11 // pred_check
          %p143 = pneg %p97
        $region18: #{tpu_custom_call.1} parent=11 // pred_check_branch
          %145 = sbr.rel (%p143) target = $region20
        $region19: #{tpu_custom_call.1} parent=11 // pred_region
          _
        $region20: #{tpu_custom_call.1} parent=11 // pred_fallthru
          _
      $region12: #{tpu_custom_call.1} parent=5 // pred_fallthru
        _
      %p146 = scmp.lt.s32.totalorder %s15, 2
      // Predicated region
      $region21: #{tpu_custom_call.1} parent=5 // pred_check
        %p147 = pneg %p146
      $region22: #{tpu_custom_call.1} parent=5 // pred_check_branch
        %149 = sbr.rel (%p147) target = $region24
      $region23: #{tpu_custom_call.1} parent=5 // pred_region
        // Predicated region
        $region25: #{tpu_custom_call.1} parent=23 // pred_check
          %p150 = pneg %p49
        $region26: #{tpu_custom_call.1} parent=23 // pred_check_branch
          %152 = sbr.rel (%p150) target = $region28
        $region27: #{tpu_custom_call.1} parent=23 // pred_region
          %s153 = sand.u32 %s39, 1
          %s154 = scalar_lea.sflag [#allocation3], %s153
          %s155 = sand.u32 %s39, 1
          %s156 = smul.addr %s155, 8
          %s157 = scalar_lea.vmem [#allocation2], %s156
          %s158 = smul.u32 2, %s23
          %s160 = ssub.s32 128, 128
          %161 = vsyncadd %s154, %s160
          %s162 = smul.addr %s22, 2
          %s163 = sadd.s32 %s158, %s162
          %s164 = smul.addr %s163, 64
          %s165 = scalar_lea.hbm %s0, %s164
          %s167 = sshll.u32 %s157, 4
          %s168 = int_to_ptr.vmem [resolvable:$true] %s167
          %170 = dma.hbm_to_vmem [thread:$0]  %s165, 128, %s168, %s154
        $region28: #{tpu_custom_call.1} parent=23 // pred_fallthru
          _
      $region24: #{tpu_custom_call.1} parent=5 // pred_fallthru
        _
      %p171 = scmp.le.s32.totalorder 1, %s15
      %p172 = scmp.lt.s32.totalorder %s15, 3
      %p173 = pnand %p171, %p172
      %p174 = pneg %p173
      // Predicated region
      $region29: #{tpu_custom_call.1} parent=5 // pred_check
        _
      $region30: #{tpu_custom_call.1} parent=5 // pred_check_branch
        %176 = sbr.rel (%p173) target = $region32
      $region31: #{tpu_custom_call.1} parent=5 // pred_region
        %s177 = ssub.s32 %s15, 1
        %s178 = sand.u32 %s42, 1
        %s179 = scalar_lea.sflag [#allocation3], %s178
        %s180 = sand.u32 %s42, 1
        %s181 = smul.addr %s180, 8
        %s182 = scalar_lea.vmem [#allocation2], %s181
        // Predicated region
        $region33: #{tpu_custom_call.1} parent=31 // pred_check
          %p183 = pneg %p55
        $region34: #{tpu_custom_call.1} parent=31 // pred_check_branch
          %185 = sbr.rel (%p183) target = $region36
        $region35: #{tpu_custom_call.1} parent=31 // pred_region
          %186 = dma.done %s179, 128
        $region36: #{tpu_custom_call.1} parent=31 // pred_fallthru
          _
        %s187 = sand.u32 %s42, 1
        %s188 = scalar_lea.sflag [#allocation3], %s187
        %s189 = sand.u32 %s42, 1
        %s190 = smul.addr %s189, 8
        %s191 = scalar_lea.vmem [#allocation2], %s190
        %p192 = pneg %p55
        %p193 = pneg %p52
        %p194 = pneg %p76
        %p195 = pneg %p73
        %p196 = pneg %p97
        %p197 = pneg %p94
        %p198 = pneg %p125
        %p199 = pneg %p122
        %s200 = sand.u32 %s112, 1
        %s201 = scalar_lea.sflag [#allocation4], %s200
        %s202 = sand.u32 %s112, 1
        %s203 = smul.addr %s202, 8
        %s204 = scalar_lea.vmem [#allocation5], %s203
        %s205 = smul.u32 2, %s25
        %s206 = smul.u32 2, %s25
        %v207 = vld [vmem:[%s182] sm:$0xff]
        %v209 = vcombine.high %v207, %v207
        %vm211 = vcmask 1043456
        %v212 = vsel %vm211, %v207, 0.0
        %v213 = vrot.slane %v212, 4
        %v214 = vadd.f32 %v212, %v213
        %v215 = vrot.slane %v214, 2
        %v216 = vadd.f32 %v214, %v215
        %v217 = vrot.slane %v216, 1
        %v218 = vadd.f32 %v216, %v217
        %v219 = vsel %vm211, %v209, 0.0
        %v220 = vrot.slane %v219, 4
        %v221 = vadd.f32 %v219, %v220
        %v222 = vrot.slane %v221, 2
        %v223 = vadd.f32 %v221, %v222
        %v224 = vrot.slane %v223, 1
        %v225 = vadd.f32 %v223, %v224
        %v226 = vmul.f32 %v218, 0.25
        %v227 = vmul.f32 %v225, 0.25
        %v228 = vmul.f32 %v207, %v207
        %v230 = vcombine.high %v228, %v228
        %v232 = vsel %vm211, %v228, 0.0
        %v233 = vrot.slane %v232, 4
        %v234 = vadd.f32 %v232, %v233
        %v235 = vrot.slane %v234, 2
        %v236 = vadd.f32 %v234, %v235
        %v237 = vrot.slane %v236, 1
        %v238 = vadd.f32 %v236, %v237
        %v239 = vsel %vm211, %v230, 0.0
        %v240 = vrot.slane %v239, 4
        %v241 = vadd.f32 %v239, %v240
        %v242 = vrot.slane %v241, 2
        %v243 = vadd.f32 %v241, %v242
        %v244 = vrot.slane %v243, 1
        %v245 = vadd.f32 %v243, %v244
        %v246 = vmul.f32 %v238, 0.25
        %v247 = vmul.f32 %v245, 0.25
        %v248 = vmul.f32 %v226, %v226
        %v249 = vmul.f32 %v227, %v227
        %v250 = vsub.f32 %v246, %v248
        %v251 = vsub.f32 %v247, %v249
        %v252 = vadd.f32 %v250, 1e-06
        %v253 = vadd.f32 %v251, 1e-06
        %v254 = vrsqrt.pop %v252
        %v255 = vrsqrt.pop %v253
        %v256 = vld [vmem:[%s1] sm:$0xf]
        %v257 = vld [vmem:[%s2] sm:$0xf]
        %v260 = vcombine.low %v226, %v227
        %v262 = vsub.f32 %v207, %v260
        %v265 = vcombine.low %v254, %v255
        %v267 = vmul.f32 %v262, %v265
        %269 = vset.pattern.permute.xlu0 0
        %270 = vperm.xlu0 %269, %v256
        %v271 = vpop.permute.xlu0 %270
        %v273 = vunpack.c.l.s4 839922192
        %v274 = vunpack.c.0.s8 %v273
        %v275 = vlaneseq
        %v276 = vshrl.u32 %v275, 7
        %v277 = vsub.s32 %v274, %v276
        %v278 = vrot.slane %v271, %v277
        %v280 = vmul.f32 %v267, %v278
        %282 = vset.pattern.permute.xlu0 0
        %283 = vperm.xlu0 %282, %v257
        %v284 = vpop.permute.xlu0 %283
        %v286 = vunpack.c.l.s4 839922192
        %v287 = vunpack.c.0.s8 %v286
        %v288 = vlaneseq
        %v289 = vshrl.u32 %v288, 7
        %v290 = vsub.s32 %v287, %v289
        %v291 = vrot.slane %v284, %v290
        %v293 = vadd.f32 %v280, %v291
        %294 = vst [vmem:[%s204] sm:$0xff] %v293
        %s295 = sand.u32 %s112, 1
        %s296 = scalar_lea.sflag [#allocation4], %s295
        %s297 = sand.u32 %s112, 1
        %s298 = smul.addr %s297, 8
        %s299 = scalar_lea.vmem [#allocation5], %s298
        // Predicated region
        $region37: #{tpu_custom_call.1} parent=31 // pred_check
          %p300 = pneg %p122
        $region38: #{tpu_custom_call.1} parent=31 // pred_check_branch
          %302 = sbr.rel (%p300) target = $region40
        $region39: #{tpu_custom_call.1} parent=31 // pred_region
          %s303 = smul.u32 2, %s25
          %s305 = ssub.s32 128, 128
          %306 = vsyncadd %s296, %s305
          %s307 = smul.addr %s24, 2
          %s308 = sadd.s32 %s303, %s307
          %s309 = smul.addr %s308, 64
          %s310 = scalar_lea.hbm %s3, %s309
          %s312 = sshll.u32 %s299, 4
          %s313 = int_to_ptr.vmem [resolvable:$true] %s312
          %315 = dma.vmem_to_hbm [thread:$0]  %s313, 128, %s310, %s296
        $region40: #{tpu_custom_call.1} parent=31 // pred_fallthru
          _
      $region32: #{tpu_custom_call.1} parent=5 // pred_fallthru
        _
      %p316 = scmp.le.s32.totalorder 2, %s15
      // Predicated region
      $region41: #{tpu_custom_call.1} parent=5 // pred_check
        %p317 = pneg %p316
      $region42: #{tpu_custom_call.1} parent=5 // pred_check_branch
        %319 = sbr.rel (%p317) target = $region44
      $region43: #{tpu_custom_call.1} parent=5 // pred_region
        %s320 = ssub.s32 %s15, 2
        // Predicated region
        $region45: #{tpu_custom_call.1} parent=43 // pred_check
          %p321 = pneg %p128
        $region46: #{tpu_custom_call.1} parent=43 // pred_check_branch
          %323 = sbr.rel (%p321) target = $region48
        $region47: #{tpu_custom_call.1} parent=43 // pred_region
          %s324 = sand.u32 %s113, 1
          %s325 = scalar_lea.sflag [#allocation4], %s324
          %s326 = sand.u32 %s113, 1
          %s327 = smul.addr %s326, 8
          %s328 = scalar_lea.vmem [#allocation5], %s327
          %329 = dma.done %s325, 128
        $region48: #{tpu_custom_call.1} parent=43 // pred_fallthru
          _
      $region44: #{tpu_custom_call.1} parent=5 // pred_fallthru
        _
    $region6: #{tpu_custom_call.1} parent=1 // loop_footer
      %s19 = sadd.s32 1, %s15
    $region7: #{tpu_custom_call.1} parent=1 // loop_footer_branch
      %14 = sbr.rel target = $region3
    $region8: #{tpu_custom_call.1} parent=1 // loop_exit
      _
    %330 = vsyncpa [#allocation3], 1
    %s331 = scalar_lea.sflag [#allocation3], 1
    %332 = vsyncpa %s331, 1
    %333 = vsyncpa [#allocation4], 1
    %s334 = scalar_lea.sflag [#allocation4], 1
    %335 = vsyncpa %s334, 1

</llo_original>
